<compile_context>
chip_gen: v6e
topology: v6e:2x2x1
jax: 0.10.0
libtpu: 0.0.40
codegen_flags: <defaults>
</compile_context>

<pallas_src>
import functools
import math

import jax
import jax.numpy as jnp
from jax.experimental import pallas as pl
from jax.experimental.pallas import tpu as pltpu


def _gelu_exact(x):
    # F.gelu default (approximate='none') -> erf-based gelu.
    return 0.5 * x * (1.0 + jax.lax.erf(x * (1.0 / jnp.sqrt(2.0).astype(x.dtype))))


def _pelu(x):
    # elu(x) + 1  ==  x + 1 for x > 0,  exp(x) for x <= 0.
    return jnp.where(x > 0, x + 1.0, jnp.exp(x))


def _feature_map_kernel(x_ref, w1_ref, b1_ref, w2_ref, b2_ref, o_ref):
    # x_ref : (tm, P*D)    packed rows, lane-dense
    # w1_ref: (P*D, P*H)   block-diagonal linear1 weight
    # b1_ref: (1, P*H)     tiled linear1 bias
    # w2_ref: (P*H, P*D)   block-diagonal linear2 weight
    # b2_ref: (1, P*D)     tiled linear2 bias
    # o_ref : (tm, P*D)
    x = x_ref[...]
    w1 = w1_ref[...]
    w2 = w2_ref[...]

    # linear1 (+bias) -> gelu; accumulate and do elementwise math in f32.
    h = jnp.dot(x, w1, preferred_element_type=jnp.float32)
    h = _gelu_exact(h + b1_ref[...].astype(jnp.float32))
    # TODO(synk): nn.Dropout (applied twice in the torch forward) omitted — identity in eval mode.

    # linear2 (+bias) -> pelu.  Cast h to the weight dtype so a bf16 deployment
    # keeps the fast MXU path (no-op for f32 weights).
    y = jnp.dot(h.astype(w2.dtype), w2, preferred_element_type=jnp.float32)
    y = _pelu(y + b2_ref[...].astype(jnp.float32))

    o_ref[...] = y.astype(o_ref.dtype)


def _round_up(x, m):
    return ((x + m - 1) // m) * m


def _target_lane_width():
    # v6e/v7x MXUs take 256-wide contractions; v5e and earlier are 128-wide.
    try:
        kind = jax.devices()[0].device_kind.lower()
    except Exception:
        return 128
    return 256 if ("v6" in kind or "v7" in kind) else 128


def _packing_factor(d, target_lane):
    """Rows packed per lane-row: smallest P with (P*d) % 128 == 0 and P*d >= target_lane."""
    if d % 128 == 0:
        return 1
    base = 128 // math.gcd(d, 128)
    p = base
    while p * d < target_lane:
        p += base
    return p


@functools.partial(jax.jit, static_argnames=("tm",))
def generalized_feature_map(x, w1, b1, w2, b2, *, tm=1024):
    """x: (..., query_dims) -> (..., query_dims).  Same semantics as the torch
    module in eval mode.  `tm` is the row tile in *packed* rows (sweep 512-4096)."""
    orig_shape = x.shape
    D = orig_shape[-1]
    H = w1.shape[1]
    assert w1.shape == (D, H) and w2.shape == (H, D)
    assert b1.shape[-1] == H and b2.shape[-1] == D

    P = _packing_factor(D, _target_lane_width())
    lane = P * D
    hidden = P * H

    x2d = x.reshape(-1, D)
    n = x2d.shape[0]

    # Pad only to a multiple of the packing factor (<= P-1 rows); padding to a
    # multiple of tm would cost a full extra HBM read+write of x.
    n_pad = _round_up(n, P)
    if n_pad != n:
        x2d = jnp.pad(x2d, ((0, n_pad - n), (0, 0)))
    rows = n_pad // P
    xp = x2d.reshape(rows, lane)                 # free row-major reshape

    # Block-diagonal weights / tiled biases (built once, a few hundred KB).
    eye_p = jnp.eye(P, dtype=w1.dtype)
    w1b = jnp.kron(eye_p, w1)                    # (P*D, P*H)
    w2b = jnp.kron(eye_p.astype(w2.dtype), w2)   # (P*H, P*D)
    b1b = jnp.tile(b1, P).reshape(1, hidden)
    b2b = jnp.tile(b2, P).reshape(1, lane)

    # Row tile: multiple of 8, capped to the data; for mid-size problems keep at
    # least 2 grid steps so v7x's two TensorCores both get work.
    tm = max(8, tm - tm % 8)
    tm = min(tm, _round_up(rows, 8))
    if rows >= 512:
        tm = min(tm, _round_up(pl.cdiv(rows, 2), 8))
    grid = pl.cdiv(rows, tm)

    out = pl.pallas_call(
        _feature_map_kernel,
        out_shape=jax.ShapeDtypeStruct((rows, lane), x.dtype),
        grid_spec=pltpu.PrefetchScalarGridSpec(
            num_scalar_prefetch=0,
            grid=(grid,),
            in_specs=[
                pl.BlockSpec((tm, lane), lambda i: (i, 0)),       # packed x rows
                # Constant index_map keeps the (tiny) weights/biases resident
                # across grid steps.  (pl.Buffered(1) would additionally halve
                # their VMEM footprint; negligible at these sizes.)
                pl.BlockSpec((lane, hidden), lambda i: (0, 0)),   # W1 block-diag
                pl.BlockSpec((1, hidden), lambda i: (0, 0)),      # b1 tiled
                pl.BlockSpec((hidden, lane), lambda i: (0, 0)),   # W2 block-diag
                pl.BlockSpec((1, lane), lambda i: (0, 0)),        # b2 tiled
            ],
            out_specs=pl.BlockSpec((tm, lane), lambda i: (i, 0)),
        ),
        compiler_params=pltpu.CompilerParams(
            dimension_semantics=("parallel",)),
    )(xp, w1b, b1b, w2b, b2b)

    out = out.reshape(n_pad, D)
    if n_pad != n:
        out = out[:n]
    return out.reshape(orig_shape)


def _reference(x, w1, b1, w2, b2):
    xf = x.astype(jnp.float32)
    h = _gelu_exact(
        jnp.dot(xf, w1.astype(jnp.float32), precision=jax.lax.Precision.HIGHEST)
        + b1.astype(jnp.float32))
    y = (jnp.dot(h, w2.astype(jnp.float32), precision=jax.lax.Precision.HIGHEST)
         + b2.astype(jnp.float32))
    return _pelu(y).astype(x.dtype)


if __name__ == "__main__":
    # Small shapes: x = (batch=2, seq=8, heads=4, query_dims=32), hidden_dims=64.
    query_dims = 32
    hidden_dims = 64
    key = jax.random.PRNGKey(0)
    kx, k1, k2, k3, k4 = jax.random.split(key, 5)

    x = jax.random.normal(kx, (2, 8, 4, query_dims), dtype=jnp.float32)

    # Deterministic parameter init (uniform, torch-Linear-like scale 1/sqrt(fan_in)).
    lim1 = 1.0 / jnp.sqrt(query_dims)
    lim2 = 1.0 / jnp.sqrt(hidden_dims)
    w1 = jax.random.uniform(k1, (query_dims, hidden_dims), jnp.float32, -lim1, lim1)
    b1 = jax.random.uniform(k2, (hidden_dims,), jnp.float32, -lim1, lim1)
    w2 = jax.random.uniform(k3, (hidden_dims, query_dims), jnp.float32, -lim2, lim2)
    b2 = jax.random.uniform(k4, (query_dims,), jnp.float32, -lim2, lim2)

    y = generalized_feature_map(x, w1, b1, w2, b2)
    y = jax.block_until_ready(y)

    y_ref = _reference(x, w1, b1, w2, b2)
    assert y.shape == x.shape
    max_err = float(jnp.abs(y - y_ref).max())
    assert jnp.allclose(y, y_ref, atol=1e-4, rtol=1e-4), max_err

    print("KERNEL_OK")
</pallas_src>

<mosaic_0001>
module attributes {stable_mosaic.version = 11 : i64} {
  func.func @_feature_map_kernel(%arg0: i32, %arg1: memref<16x128xf32, #tpu.memory_space<vmem>>, %arg2: memref<128x256xf32, #tpu.memory_space<vmem>>, %arg3: memref<1x256xf32, #tpu.memory_space<vmem>>, %arg4: memref<256x128xf32, #tpu.memory_space<vmem>>, %arg5: memref<1x128xf32, #tpu.memory_space<vmem>>, %arg6: memref<16x128xf32, #tpu.memory_space<vmem>>) attributes {dimension_semantics = [#tpu.dimension_semantics<parallel>], iteration_bounds = array<i64: 1>, scalar_prefetch = 0 : i64, scratch_operands = 0 : i64, tpu.core_type = #tpu.core_type<tc>, window_params = [{transform_indices = @transform_0, window_bounds = array<i64: 16, 128>}, {pipeline_mode = #tpu.pipeline_mode<synchronous>, transform_indices = @transform_1, window_bounds = array<i64: 128, 256>}, {pipeline_mode = #tpu.pipeline_mode<synchronous>, transform_indices = @transform_2, window_bounds = array<i64: 1, 256>}, {pipeline_mode = #tpu.pipeline_mode<synchronous>, transform_indices = @transform_3, window_bounds = array<i64: 256, 128>}, {pipeline_mode = #tpu.pipeline_mode<synchronous>, transform_indices = @transform_4, window_bounds = array<i64: 1, 128>}, {transform_indices = @transform_5, window_bounds = array<i64: 16, 128>}]} {
    %c0 = arith.constant 0 : index
    %c0_0 = arith.constant 0 : index
    %0 = vector.load %arg1[%c0, %c0_0] : memref<16x128xf32, #tpu.memory_space<vmem>>, vector<16x128xf32>
    %c0_1 = arith.constant 0 : index
    %c0_2 = arith.constant 0 : index
    %1 = vector.load %arg2[%c0_1, %c0_2] : memref<128x256xf32, #tpu.memory_space<vmem>>, vector<128x256xf32>
    %c0_3 = arith.constant 0 : index
    %c0_4 = arith.constant 0 : index
    %2 = vector.load %arg4[%c0_3, %c0_4] : memref<256x128xf32, #tpu.memory_space<vmem>>, vector<256x128xf32>
    %cst = arith.constant dense<0.000000e+00> : vector<16x256xf32>
    %3 = tpu.matmul %0, %1, %cst {dimension_numbers = #tpu.dot_dimension_numbers<[1], [0], [0], [1], [0, 0, 1, 1], [], []>} : vector<16x128xf32>, vector<128x256xf32>, vector<16x256xf32> -> vector<16x256xf32>
    %c0_5 = arith.constant 0 : index
    %c0_6 = arith.constant 0 : index
    %4 = vector.load %arg3[%c0_5, %c0_6] : memref<1x256xf32, #tpu.memory_space<vmem>>, vector<1x256xf32>
    %5 = vector.broadcast %4 : vector<1x256xf32> to vector<16x256xf32>
    %6 = arith.addf %3, %5 : vector<16x256xf32>
    %cst_7 = arith.constant 5.000000e-01 : f32
    %7 = vector.broadcast %cst_7 : f32 to vector<16x256xf32>
    %8 = arith.mulf %7, %6 : vector<16x256xf32>
    %cst_8 = arith.constant 2.000000e+00 : f32
    %9 = math.sqrt %cst_8 : f32
    %cst_9 = arith.constant 1.000000e+00 : f32
    %10 = arith.divf %cst_9, %9 : f32
    %11 = vector.broadcast %10 : f32 to vector<16x256xf32>
    %12 = arith.mulf %6, %11 : vector<16x256xf32>
    %13 = math.erf %12 : vector<16x256xf32>
    %cst_10 = arith.constant 1.000000e+00 : f32
    %14 = vector.broadcast %cst_10 : f32 to vector<16x256xf32>
    %15 = arith.addf %14, %13 : vector<16x256xf32>
    %16 = arith.mulf %8, %15 : vector<16x256xf32>
    %cst_11 = arith.constant dense<0.000000e+00> : vector<16x128xf32>
    %17 = tpu.matmul %16, %2, %cst_11 {dimension_numbers = #tpu.dot_dimension_numbers<[1], [0], [0], [1], [0, 0, 1, 1], [], []>} : vector<16x256xf32>, vector<256x128xf32>, vector<16x128xf32> -> vector<16x128xf32>
    %c0_12 = arith.constant 0 : index
    %c0_13 = arith.constant 0 : index
    %18 = vector.load %arg5[%c0_12, %c0_13] : memref<1x128xf32, #tpu.memory_space<vmem>>, vector<1x128xf32>
    %19 = vector.broadcast %18 : vector<1x128xf32> to vector<16x128xf32>
    %20 = arith.addf %17, %19 : vector<16x128xf32>
    %cst_14 = arith.constant 0.000000e+00 : f32
    %21 = vector.broadcast %cst_14 : f32 to vector<16x128xf32>
    %22 = arith.cmpf ogt, %20, %21 : vector<16x128xf32>
    %cst_15 = arith.constant 1.000000e+00 : f32
    %23 = vector.broadcast %cst_15 : f32 to vector<16x128xf32>
    %24 = arith.addf %20, %23 : vector<16x128xf32>
    %25 = math.exp %20 : vector<16x128xf32>
    %26 = arith.select %22, %24, %25 : vector<16x128xi1>, vector<16x128xf32>
    %c0_16 = arith.constant 0 : index
    %c0_17 = arith.constant 0 : index
    %27 = vector.load %arg6[%c0_16, %c0_17] : memref<16x128xf32, #tpu.memory_space<vmem>>, vector<16x128xf32>
    tpu.vector_store %arg6[%c0_16, %c0_17], %26 {strides = array<i32>} : memref<16x128xf32, #tpu.memory_space<vmem>>, vector<16x128xf32>,
    return
  }
  func.func @transform_0(%arg0: i32) -> (i32, i32) {
    %c0_i32 = arith.constant 0 : i32
    %c0_i32_0 = arith.constant 0 : i32
    return %arg0, %c0_i32 : i32, i32
  }
  func.func @transform_1(%arg0: i32) -> (i32, i32) {
    %c0_i32 = arith.constant 0 : i32
    %c0_i32_0 = arith.constant 0 : i32
    %c0_i32_1 = arith.constant 0 : i32
    return %c0_i32, %c0_i32_0 : i32, i32
  }
  func.func @transform_2(%arg0: i32) -> (i32, i32) {
    %c0_i32 = arith.constant 0 : i32
    %c0_i32_0 = arith.constant 0 : i32
    %c0_i32_1 = arith.constant 0 : i32
    return %c0_i32, %c0_i32_0 : i32, i32
  }
  func.func @transform_3(%arg0: i32) -> (i32, i32) {
    %c0_i32 = arith.constant 0 : i32
    %c0_i32_0 = arith.constant 0 : i32
    %c0_i32_1 = arith.constant 0 : i32
    return %c0_i32, %c0_i32_0 : i32, i32
  }
  func.func @transform_4(%arg0: i32) -> (i32, i32) {
    %c0_i32 = arith.constant 0 : i32
    %c0_i32_0 = arith.constant 0 : i32
    %c0_i32_1 = arith.constant 0 : i32
    return %c0_i32, %c0_i32_0 : i32, i32
  }
  func.func @transform_5(%arg0: i32) -> (i32, i32) {
    %c0_i32 = arith.constant 0 : i32
    %c0_i32_0 = arith.constant 0 : i32
    return %arg0, %c0_i32 : i32, i32
  }
}

</mosaic_0001>

<llo_original>
// kernel: tile.13
$region0: #{tile.13}
  #allocation0 [shape = 's32[1]{0}', space=sflag, size = 0x4, scoped, tag = 'scoped memory for tile.13']
  %s0 = inlined_call_operand.vmem [shape: f32[64], index: 0, kind: input, shape index: {}]
  %s1 = inlined_call_operand.vmem [shape: f32[4,64], index: 1, kind: output, shape index: {}]
  // Predicated region
  $region2: #{tile.13} parent=0 // pred_check
    _
  $region3: #{tile.13} parent=0 // pred_check_branch
    %3 = sbr.rel (0) target = $region5
  $region4: #{tile.13} parent=0 // pred_region
    _
  $region5: #{tile.13} parent=0 // pred_fallthru
    _
  %v4 = vld [vmem:[%s0] ss:$0 sm:$0xff]
  %5 = vst [vmem:[%s1] sm:$0xf] %v4

// kernel: tile.14
$region0: #{tile.14}
  %s0 = inlined_call_operand.vmem [shape: f32[4,64], index: 0, kind: input, shape index: {}]
  %s1 = inlined_call_operand.vmem [shape: f32[1,256], index: 1, kind: output, shape index: {}]
  $region1: #{tile.14} parent=0
    #allocation0 [shape = 'u8[8192]{0}', space=vmem, size = 0x2000, scoped, tag = 'scoped mem for output reshape']
    #allocation1 [shape = 'u8[4096]{0}', space=vmem, size = 0x1000, scoped, tag = 'scoped mem for input reshape']
    %s3 = sshll.u32 1, 4
    %s4 = ssub.s32 %s3, 1
    %v5 = vld [vmem:[%s0] sm:%s4]
    %6 = vst [vmem:[#allocation1] sm:%s4] %v5
    %s7 = smov 3
    %v8 = vld [vmem:[#allocation1] ss:$2 sm:%s7]
    %vm9 = vcmask 523264
    %10 = vst.msk [vmem:[#allocation0] ss:$8 sm:$0x3] %vm9, %v8
    %s11 = scalar_lea.vmem [#allocation1], 1
    %s12 = smov 3
    %v13 = vld [vmem:[%s11] ss:$2 sm:%s12]
    %14 = vrot.lane.b32.xlu0 %v13, 64
    %v15 = vpop.permute.xlu0 %14
    %vm16 = vcmask 1048064
    %17 = vst.msk [vmem:[#allocation0] ss:$8 sm:$0x3] %vm16, %v15
    %s19 = sshll.u32 1, 1
    %s20 = ssub.s32 %s19, 1
    %v22 = vld [vmem:[#allocation0] sm:%s20]
    %s23 = sshll.u32 1, 1
    %s24 = ssub.s32 %s23, 1
    %25 = vst [vmem:[%s1] sm:%s24] %v22
    %s26 = scalar_lea.vmem [#allocation0], 8
    %v27 = vld [vmem:[%s26] sm:%s20]
    %s28 = sshll.u32 1, 1
    %s29 = ssub.s32 %s28, 1
    %s30 = scalar_lea.vmem %s1, 1
    %31 = vst [vmem:[%s30] sm:%s29] %v27

// kernel: tile.18
$region0: #{tile.18}
  #allocation0 [shape = 's32[1]{0}', space=sflag, size = 0x4, scoped, tag = 'scoped memory for tile.18']
  %s0 = inlined_call_operand.vmem [shape: f32[32], index: 0, kind: input, shape index: {}]
  %s1 = inlined_call_operand.vmem [shape: f32[4,32], index: 1, kind: output, shape index: {}]
  // Predicated region
  $region2: #{tile.18} parent=0 // pred_check
    _
  $region3: #{tile.18} parent=0 // pred_check_branch
    %3 = sbr.rel (0) target = $region5
  $region4: #{tile.18} parent=0 // pred_region
    _
  $region5: #{tile.18} parent=0 // pred_fallthru
    _
  %v4 = vld [vmem:[%s0] ss:$0 sm:$0xff]
  %5 = vst [vmem:[%s1] sm:$0xf] %v4

// kernel: tile.19
$region0: #{tile.19}
  %s0 = inlined_call_operand.vmem [shape: f32[4,32], index: 0, kind: input, shape index: {}]
  %s1 = inlined_call_operand.vmem [shape: f32[1,128], index: 1, kind: output, shape index: {}]
  $region1: #{tile.19} parent=0
    #allocation0 [shape = 'u8[4096]{0}', space=vmem, size = 0x1000, scoped, tag = 'scoped mem for output reshape']
    #allocation1 [shape = 'u8[4096]{0}', space=vmem, size = 0x1000, scoped, tag = 'scoped mem for input reshape']
    %s3 = sshll.u32 1, 4
    %s4 = ssub.s32 %s3, 1
    %v5 = vld [vmem:[%s0] sm:%s4]
    %6 = vst [vmem:[#allocation1] sm:%s4] %v5
    %v7 = vld [vmem:[#allocation1] sm:$0x1]
    %vm8 = vcmask 261120
    %9 = vst.msk [vmem:[#allocation0] sm:$0x1] %vm8, %v7
    %s10 = scalar_lea.vmem [#allocation1], 3
    %v11 = vld [vmem:[%s10] sm:$0x1]
    %12 = vrot.lane.b32.xlu0 %v11, 96
    %v13 = vpop.permute.xlu0 %12
    %vm14 = vcmask 1048320
    %15 = vst.msk [vmem:[#allocation0] sm:$0x1] %vm14, %v13
    %s16 = scalar_lea.vmem [#allocation1], 2
    %v17 = vld [vmem:[%s16] sm:$0x1]
    %18 = vrot.lane.b32.xlu0 %v17, 64
    %v19 = vpop.permute.xlu0 %18
    %vm20 = vcmask 785920
    %21 = vst.msk [vmem:[#allocation0] sm:$0x1] %vm20, %v19
    %s22 = scalar_lea.vmem [#allocation1], 1
    %v23 = vld [vmem:[%s22] sm:$0x1]
    %24 = vrot.lane.b32.xlu0 %v23, 32
    %v25 = vpop.permute.xlu0 %24
    %vm26 = vcmask 523520
    %27 = vst.msk [vmem:[#allocation0] sm:$0x1] %vm26, %v25
    %s29 = sshll.u32 1, 1
    %s30 = ssub.s32 %s29, 1
    %v32 = vld [vmem:[#allocation0] sm:%s30]
    %s33 = sshll.u32 1, 1
    %s34 = ssub.s32 %s33, 1
    %35 = vst [vmem:[%s1] sm:%s34] %v32

// kernel: generalized_feature_map.1
$region0: #{generalized_feature_map.1}
  #allocation0 [shape = 'u32[]', space=smem, size = 0x4, offset = 0x4, fixed_abs, tag = 'smem constant byte address 0x4 - core index']
  #allocation1 [shape = 'u32[144,128]{1,0:T(1,128)}', space=vmem, size = 0x12000, scoped, tag = 'internal scratch']
  %s0 = inlined_call_operand.vmem [shape: f32[16,128], index: 0, kind: input, shape index: {}]
  %s1 = inlined_call_operand.vmem [shape: f32[128,256], index: 1, kind: input, shape index: {}]
  %s2 = inlined_call_operand.vmem [shape: f32[1,256], index: 2, kind: input, shape index: {}]
  %s3 = inlined_call_operand.vmem [shape: f32[256,128], index: 3, kind: input, shape index: {}]
  %s4 = inlined_call_operand.vmem [shape: f32[1,128], index: 4, kind: input, shape index: {}]
  %s5 = inlined_call_operand.vmem [shape: f32[16,128], index: 5, kind: output, shape index: {}]
  %s6 = sld [smem:[#allocation0]]
  $region30: #{generalized_feature_map.1} parent=0
    _
  %s8 = ssub.s32 1, %s6
  %s9 = scalar_select 0, %s8, %s6
  // Predicated region
  $region2: #{generalized_feature_map.1} parent=0 // pred_check
    _
  $region3: #{generalized_feature_map.1} parent=0 // pred_check_branch
    %11 = sbr.rel (0) target = $region5
  $region4: #{generalized_feature_map.1} parent=0 // pred_region
    _
  $region5: #{generalized_feature_map.1} parent=0 // pred_fallthru
    _
  // Predicated region
  $region6: #{generalized_feature_map.1} parent=0 // pred_check
    _
  $region7: #{generalized_feature_map.1} parent=0 // pred_check_branch
    %13 = sbr.rel (0) target = $region9
  $region8: #{generalized_feature_map.1} parent=0 // pred_region
    _
  $region9: #{generalized_feature_map.1} parent=0 // pred_fallthru
    _
  // Predicated region
  $region10: #{generalized_feature_map.1} parent=0 // pred_check
    _
  $region11: #{generalized_feature_map.1} parent=0 // pred_check_branch
    %15 = sbr.rel (0) target = $region13
  $region12: #{generalized_feature_map.1} parent=0 // pred_region
    _
  $region13: #{generalized_feature_map.1} parent=0 // pred_fallthru
    _
  // Predicated region
  $region14: #{generalized_feature_map.1} parent=0 // pred_check
    _
  $region15: #{generalized_feature_map.1} parent=0 // pred_check_branch
    %17 = sbr.rel (0) target = $region17
  $region16: #{generalized_feature_map.1} parent=0 // pred_region
    _
  $region17: #{generalized_feature_map.1} parent=0 // pred_fallthru
    _
  // Predicated region
  $region18: #{generalized_feature_map.1} parent=0 // pred_check
    _
  $region19: #{generalized_feature_map.1} parent=0 // pred_check_branch
    %19 = sbr.rel (0) target = $region21
  $region20: #{generalized_feature_map.1} parent=0 // pred_region
    _
  $region21: #{generalized_feature_map.1} parent=0 // pred_fallthru
    _
  %v20 = vld [vmem:[%s0] sm:$0xff]
  %v21 = vld [vmem:[%s0 + $0x8] sm:$0xff]
  %v22 = vld [vmem:[%s1] sm:$0xff]
  %v23 = vld [vmem:[%s1 + $0x8] sm:$0xff]
  %v24 = vld [vmem:[%s1 + $0x10] sm:$0xff]
  %v25 = vld [vmem:[%s1 + $0x18] sm:$0xff]
  %v26 = vld [vmem:[%s1 + $0x20] sm:$0xff]
  %v27 = vld [vmem:[%s1 + $0x28] sm:$0xff]
  %v28 = vld [vmem:[%s1 + $0x30] sm:$0xff]
  %v29 = vld [vmem:[%s1 + $0x38] sm:$0xff]
  %v30 = vld [vmem:[%s1 + $0x40] sm:$0xff]
  %v31 = vld [vmem:[%s1 + $0x48] sm:$0xff]
  %v32 = vld [vmem:[%s1 + $0x50] sm:$0xff]
  %v33 = vld [vmem:[%s1 + $0x58] sm:$0xff]
  %v34 = vld [vmem:[%s1 + $0x60] sm:$0xff]
  %v35 = vld [vmem:[%s1 + $0x68] sm:$0xff]
  %v36 = vld [vmem:[%s1 + $0x70] sm:$0xff]
  %v37 = vld [vmem:[%s1 + $0x78] sm:$0xff]
  %v38 = vld [vmem:[%s1 + $0x80] sm:$0xff]
  %v39 = vld [vmem:[%s1 + $0x88] sm:$0xff]
  %v40 = vld [vmem:[%s1 + $0x90] sm:$0xff]
  %v41 = vld [vmem:[%s1 + $0x98] sm:$0xff]
  %v42 = vld [vmem:[%s1 + $0xa0] sm:$0xff]
  %v43 = vld [vmem:[%s1 + $0xa8] sm:$0xff]
  %v44 = vld [vmem:[%s1 + $0xb0] sm:$0xff]
  %v45 = vld [vmem:[%s1 + $0xb8] sm:$0xff]
  %v46 = vld [vmem:[%s1 + $0xc0] sm:$0xff]
  %v47 = vld [vmem:[%s1 + $0xc8] sm:$0xff]
  %v48 = vld [vmem:[%s1 + $0xd0] sm:$0xff]
  %v49 = vld [vmem:[%s1 + $0xd8] sm:$0xff]
  %v50 = vld [vmem:[%s1 + $0xe0] sm:$0xff]
  %v51 = vld [vmem:[%s1 + $0xe8] sm:$0xff]
  %v52 = vld [vmem:[%s1 + $0xf0] sm:$0xff]
  %v53 = vld [vmem:[%s1 + $0xf8] sm:$0xff]
  %v54 = vld [vmem:[%s3] sm:$0xff]
  %v55 = vld [vmem:[%s3 + $0x8] sm:$0xff]
  %v56 = vld [vmem:[%s3 + $0x10] sm:$0xff]
  %v57 = vld [vmem:[%s3 + $0x18] sm:$0xff]
  %v58 = vld [vmem:[%s3 + $0x20] sm:$0xff]
  %v59 = vld [vmem:[%s3 + $0x28] sm:$0xff]
  %v60 = vld [vmem:[%s3 + $0x30] sm:$0xff]
  %v61 = vld [vmem:[%s3 + $0x38] sm:$0xff]
  %v62 = vld [vmem:[%s3 + $0x40] sm:$0xff]
  %v63 = vld [vmem:[%s3 + $0x48] sm:$0xff]
  %v64 = vld [vmem:[%s3 + $0x50] sm:$0xff]
  %v65 = vld [vmem:[%s3 + $0x58] sm:$0xff]
  %v66 = vld [vmem:[%s3 + $0x60] sm:$0xff]
  %v67 = vld [vmem:[%s3 + $0x68] sm:$0xff]
  %v68 = vld [vmem:[%s3 + $0x70] sm:$0xff]
  %v69 = vld [vmem:[%s3 + $0x78] sm:$0xff]
  %v70 = vld [vmem:[%s3 + $0x80] sm:$0xff]
  %v71 = vld [vmem:[%s3 + $0x88] sm:$0xff]
  %v72 = vld [vmem:[%s3 + $0x90] sm:$0xff]
  %v73 = vld [vmem:[%s3 + $0x98] sm:$0xff]
  %v74 = vld [vmem:[%s3 + $0xa0] sm:$0xff]
  %v75 = vld [vmem:[%s3 + $0xa8] sm:$0xff]
  %v76 = vld [vmem:[%s3 + $0xb0] sm:$0xff]
  %v77 = vld [vmem:[%s3 + $0xb8] sm:$0xff]
  %v78 = vld [vmem:[%s3 + $0xc0] sm:$0xff]
  %v79 = vld [vmem:[%s3 + $0xc8] sm:$0xff]
  %v80 = vld [vmem:[%s3 + $0xd0] sm:$0xff]
  %v81 = vld [vmem:[%s3 + $0xd8] sm:$0xff]
  %v82 = vld [vmem:[%s3 + $0xe0] sm:$0xff]
  %v83 = vld [vmem:[%s3 + $0xe8] sm:$0xff]
  %v84 = vld [vmem:[%s3 + $0xf0] sm:$0xff]
  %v85 = vld [vmem:[%s3 + $0xf8] sm:$0xff]
  %v86 = vld [vmem:[%s2] sm:$0x3]
  %v88 = vlaneseq
  %v89 = vshrl.u32 %v88, 7
  %v90 = vsub.s32 0, %v89
  %v91 = vrot.slane %v86, %v90
  %v92 = vlaneseq
  %v93 = vshrl.u32 %v92, 7
  %v94 = vsub.s32 1, %v93
  %v95 = vrot.slane %v86, %v94
  %98 = vmatprep.subr.mxu0 %v53
  %99 = vmatpush1.msra.mxu0 %v52
  %100 = vmatprep.subr.mxu0 %v51
  %101 = vmatpush1.msra.mxu0 %v50
  %102 = vmatprep.subr.mxu0 %v49
  %103 = vmatpush1.msra.mxu0 %v48
  %104 = vmatprep.subr.mxu0 %v47
  %105 = vmatpush1.msra.mxu0 %v46
  %106 = vmatprep.subr.mxu0 %v45
  %107 = vmatpush1.msra.mxu0 %v44
  %108 = vmatprep.subr.mxu0 %v43
  %109 = vmatpush1.msra.mxu0 %v42
  %110 = vmatprep.subr.mxu0 %v41
  %111 = vmatpush1.msra.mxu0 %v40
  %112 = vmatprep.subr.mxu0 %v39
  %113 = vmatpush1.msra.mxu0 %v38
  %114 = vmatprep.subr.mxu0 %v37
  %115 = vmatpush1.msra.mxu0 %v36
  %116 = vmatprep.subr.mxu0 %v35
  %117 = vmatpush1.msra.mxu0 %v34
  %118 = vmatprep.subr.mxu0 %v33
  %119 = vmatpush1.msra.mxu0 %v32
  %120 = vmatprep.subr.mxu0 %v31
  %121 = vmatpush1.msra.mxu0 %v30
  %122 = vmatprep.subr.mxu0 %v29
  %123 = vmatpush1.msra.mxu0 %v28
  %124 = vmatprep.subr.mxu0 %v27
  %125 = vmatpush1.msra.mxu0 %v26
  %126 = vmatprep.subr.mxu0 %v25
  %127 = vmatpush1.msra.mxu0 %v24
  %128 = vmatprep.subr.mxu0 %v23
  %129 = vmatpush1.msra.mxu0 %v22
  %130 = vmatprep.subr.mxu0 0.0
  %131 = vmatpush2.msra.mxu0 0.0
  %132 = vmatprep.subr.mxu0 0.0
  %133 = vmatpush2.msra.mxu0 0.0
  %134 = vmatprep.subr.mxu0 0.0
  %135 = vmatpush2.msra.mxu0 0.0
  %136 = vmatprep.subr.mxu0 0.0
  %137 = vmatpush2.msra.mxu0 0.0
  %138 = vmatprep.subr.mxu0 0.0
  %139 = vmatpush2.msra.mxu0 0.0
  %140 = vmatprep.subr.mxu0 0.0
  %141 = vmatpush2.msra.mxu0 0.0
  %142 = vmatprep.subr.mxu0 0.0
  %143 = vmatpush2.msra.mxu0 0.0
  %144 = vmatprep.subr.mxu0 0.0
  %145 = vmatpush2.msra.mxu0 0.0
  %146 = vmatprep.subr.mxu0 0.0
  %147 = vmatpush2.msra.mxu0 0.0
  %148 = vmatprep.subr.mxu0 0.0
  %149 = vmatpush2.msra.mxu0 0.0
  %150 = vmatprep.subr.mxu0 0.0
  %151 = vmatpush2.msra.mxu0 0.0
  %152 = vmatprep.subr.mxu0 0.0
  %153 = vmatpush2.msra.mxu0 0.0
  %154 = vmatprep.subr.mxu0 0.0
  %155 = vmatpush2.msra.mxu0 0.0
  %156 = vmatprep.subr.mxu0 0.0
  %157 = vmatpush2.msra.mxu0 0.0
  %158 = vmatprep.subr.mxu0 0.0
  %159 = vmatpush2.msra.mxu0 0.0
  %160 = vmatprep.subr.mxu0 0.0
  %161 = vmatpush2.msra.mxu0 0.0
  %162 = vmatprep.mubr.f32.mxu0 0.0
  %163 = vmatmul.mubr.f32.gmra.mxu0 %v20
  %v164 = vpop.f32.mrf.mxu0
  %v165 = vadd.f32 %v91, %v164
  %v166 = vpop.f32.mrf.mxu0
  %v167 = vadd.f32 %v95, %v166
  %168 = vmatprep.mubr.f32.mxu0 0.0
  %169 = vmatmul.mubr.f32.gmra.mxu0 %v21
  %v170 = vpop.f32.mrf.mxu0
  %v171 = vadd.f32 %v91, %v170
  %v172 = vpop.f32.mrf.mxu0
  %v173 = vadd.f32 %v95, %v172
  %174 = vdwg.mxu0
  %v175 = vmul.f32 %v165, 0.5
  %v176 = vmul.f32 %v167, 0.5
  %v177 = vmul.f32 %v171, 0.5
  %v178 = vmul.f32 %v173, 0.5
  %v179 = vmul.f32 %v165, 0.70710677
  %v180 = vmul.f32 %v167, 0.70710677
  %v181 = vmul.f32 %v171, 0.70710677
  %v182 = vmul.f32 %v173, 0.70710677
  %v183 = verf.f32.pop %v179
  %v184 = verf.f32.pop %v180
  %v185 = verf.f32.pop %v181
  %v186 = verf.f32.pop %v182
  %v187 = vadd.f32 %v183, 1.0
  %v188 = vadd.f32 %v184, 1.0
  %v189 = vadd.f32 %v185, 1.0
  %v190 = vadd.f32 %v186, 1.0
  %v191 = vmul.f32 %v175, %v187
  %v192 = vmul.f32 %v176, %v188
  %v193 = vmul.f32 %v177, %v189
  %v194 = vmul.f32 %v178, %v190
  %v195 = vld [vmem:[%s4] sm:$0x1]
  %v197 = vlaneseq
  %v198 = vshrl.u32 %v197, 7
  %v199 = vsub.s32 0, %v198
  %v200 = vrot.slane %v195, %v199
  %202 = vmatprep.subr.mxu0 0.0
  %203 = vmatpush1.msra.mxu0 %v69
  %204 = vmatprep.subr.mxu0 0.0
  %205 = vmatpush1.msra.mxu0 %v68
  %206 = vmatprep.subr.mxu0 0.0
  %207 = vmatpush1.msra.mxu0 %v67
  %208 = vmatprep.subr.mxu0 0.0
  %209 = vmatpush1.msra.mxu0 %v66
  %210 = vmatprep.subr.mxu0 0.0
  %211 = vmatpush1.msra.mxu0 %v65
  %212 = vmatprep.subr.mxu0 0.0
  %213 = vmatpush1.msra.mxu0 %v64
  %214 = vmatprep.subr.mxu0 0.0
  %215 = vmatpush1.msra.mxu0 %v63
  %216 = vmatprep.subr.mxu0 0.0
  %217 = vmatpush1.msra.mxu0 %v62
  %218 = vmatprep.subr.mxu0 0.0
  %219 = vmatpush1.msra.mxu0 %v61
  %220 = vmatprep.subr.mxu0 0.0
  %221 = vmatpush1.msra.mxu0 %v60
  %222 = vmatprep.subr.mxu0 0.0
  %223 = vmatpush1.msra.mxu0 %v59
  %224 = vmatprep.subr.mxu0 0.0
  %225 = vmatpush1.msra.mxu0 %v58
  %226 = vmatprep.subr.mxu0 0.0
  %227 = vmatpush1.msra.mxu0 %v57
  %228 = vmatprep.subr.mxu0 0.0
  %229 = vmatpush1.msra.mxu0 %v56
  %230 = vmatprep.subr.mxu0 0.0
  %231 = vmatpush1.msra.mxu0 %v55
  %232 = vmatprep.subr.mxu0 0.0
  %233 = vmatpush1.msra.mxu0 %v54
  %234 = vmatprep.subr.mxu0 0.0
  %235 = vmatpush2.msra.mxu0 %v85
  %236 = vmatprep.subr.mxu0 0.0
  %237 = vmatpush2.msra.mxu0 %v84
  %238 = vmatprep.subr.mxu0 0.0
  %239 = vmatpush2.msra.mxu0 %v83
  %240 = vmatprep.subr.mxu0 0.0
  %241 = vmatpush2.msra.mxu0 %v82
  %242 = vmatprep.subr.mxu0 0.0
  %243 = vmatpush2.msra.mxu0 %v81
  %244 = vmatprep.subr.mxu0 0.0
  %245 = vmatpush2.msra.mxu0 %v80
  %246 = vmatprep.subr.mxu0 0.0
  %247 = vmatpush2.msra.mxu0 %v79
  %248 = vmatprep.subr.mxu0 0.0
  %249 = vmatpush2.msra.mxu0 %v78
  %250 = vmatprep.subr.mxu0 0.0
  %251 = vmatpush2.msra.mxu0 %v77
  %252 = vmatprep.subr.mxu0 0.0
  %253 = vmatpush2.msra.mxu0 %v76
  %254 = vmatprep.subr.mxu0 0.0
  %255 = vmatpush2.msra.mxu0 %v75
  %256 = vmatprep.subr.mxu0 0.0
  %257 = vmatpush2.msra.mxu0 %v74
  %258 = vmatprep.subr.mxu0 0.0
  %259 = vmatpush2.msra.mxu0 %v73
  %260 = vmatprep.subr.mxu0 0.0
  %261 = vmatpush2.msra.mxu0 %v72
  %262 = vmatprep.subr.mxu0 0.0
  %263 = vmatpush2.msra.mxu0 %v71
  %264 = vmatprep.subr.mxu0 0.0
  %265 = vmatpush2.msra.mxu0 %v70
  %266 = vmatprep.mubr.f32.mxu0 %v192
  %267 = vmatmul.mubr.f32.gmra.mxu0 %v191
  %v268 = vpop.f32.mrf.mxu0
  %v269 = vadd.f32 %v200, %v268
  %v270 = vpop.f32.mrf.mxu0
  %271 = vmatprep.mubr.f32.mxu0 %v194
  %272 = vmatmul.mubr.f32.gmra.mxu0 %v193
  %v273 = vpop.f32.mrf.mxu0
  %v274 = vadd.f32 %v200, %v273
  %v275 = vpop.f32.mrf.mxu0
  %276 = vdwg.mxu0
  %vm277 = vcmp.gt.f32.partialorder %v269, 0.0
  %vm278 = vcmp.gt.f32.partialorder %v274, 0.0
  %v279 = vadd.f32 %v269, 1.0
  %v280 = vadd.f32 %v274, 1.0
  %v281 = vmul.f32 %v269, 1.442695
  %v282 = vpow.pop %v281
  %v283 = vmul.f32 %v274, 1.442695
  %v284 = vpow.pop %v283
  %v285 = vsel %vm277, %v279, %v282
  %v286 = vsel %vm278, %v280, %v284
  %287 = vst [vmem:[%s5] sm:$0xff] %v285
  %288 = vst [vmem:[%s5 + $0x8] sm:$0xff] %v286
  // Predicated region
  $region22: #{generalized_feature_map.1} parent=0 // pred_check
    _
  $region23: #{generalized_feature_map.1} parent=0 // pred_check_branch
    %290 = sbr.rel (0) target = $region25
  $region24: #{generalized_feature_map.1} parent=0 // pred_region
    _
  $region25: #{generalized_feature_map.1} parent=0 // pred_fallthru
    _
  // Predicated region
  $region26: #{generalized_feature_map.1} parent=0 // pred_check
    _
  $region27: #{generalized_feature_map.1} parent=0 // pred_check_branch
    %292 = sbr.rel (0) target = $region29
  $region28: #{generalized_feature_map.1} parent=0 // pred_region
    _
  $region29: #{generalized_feature_map.1} parent=0 // pred_fallthru
    _

</llo_original>
